<compile_context>
chip_gen: v5e
topology: v5e:2x2
jax: 0.10.0
libtpu: 0.0.40
codegen_flags: <defaults>
</compile_context>

<pallas_src>
import jax
import jax.numpy as jnp
from jax.experimental import pallas as pl
from jax.experimental.pallas import tpu as pltpu

CLASSES = 10
HIDDEN = 1000
CLASSES_PAD = 128   # 10 -> 128: lane-dense (unmasked) output stores
TILE_B_MAX = 256    # batch tile for very large batches (multiple of MXU M-dim)


def _fused_linear_kernel(x_ref, w_ref, b_ref, o_ref):
    # x_ref: (TILE_B, F)          bf16, flattened NCHW input tile
    # w_ref: (F, CLASSES_PAD)     bf16, folded backbone+head weight (resident)
    # b_ref: (1, CLASSES_PAD)     f32,  folded bias (resident)
    # o_ref: (TILE_B, CLASSES_PAD) f32 logits (padded)
    o_ref[...] = (
        jnp.dot(x_ref[...], w_ref[...], preferred_element_type=jnp.float32)
        + b_ref[...]
    ).astype(o_ref.dtype)


def model_setting_forward(x_nchw, w_fold, b_fold):
    """x_nchw: (B, C, H, W) float32. Returns logits (B, CLASSES) float32."""
    B, C, H, W = x_nchw.shape
    F = C * H * W
    # same row-major flatten as torch .view
    x_flat = x_nchw.reshape(B, F).astype(jnp.bfloat16)

    # One resident block for small batches; tile batch ("parallel" -> megacore /
    # v7x's second TensorCore) only when B is large enough to matter.
    if B <= TILE_B_MAX:
        tile_b = B
    else:
        assert B % TILE_B_MAX == 0, "large batch must be a multiple of TILE_B_MAX"
        tile_b = TILE_B_MAX
    grid = (B // tile_b,)

    out_padded = pl.pallas_call(
        _fused_linear_kernel,
        out_shape=jax.ShapeDtypeStruct((B, CLASSES_PAD), jnp.float32),
        grid_spec=pltpu.PrefetchScalarGridSpec(
            num_scalar_prefetch=0,
            grid=grid,
            in_specs=[
                pl.BlockSpec((tile_b, F), lambda i: (i, 0)),            # x batch tile
                pl.BlockSpec((F, CLASSES_PAD), lambda i: (0, 0)),       # folded W (resident)
                pl.BlockSpec((1, CLASSES_PAD), lambda i: (0, 0)),       # folded bias (resident)
            ],
            out_specs=pl.BlockSpec((tile_b, CLASSES_PAD), lambda i: (i, 0)),
        ),
        compiler_params=pltpu.CompilerParams(
            dimension_semantics=("parallel",),   # independent batch tiles
        ),
    )(x_flat, w_fold, b_fold)
    return out_padded[:, :CLASSES]


def init_params(key, in_features, hidden=HIDDEN, classes=CLASSES):
    """nn.Linear-style uniform(-1/sqrt(fan_in), 1/sqrt(fan_in)) init, fp32,
    stored as (in, out) so forward is x @ W + b (== x @ W_torch.T + b)."""
    k1, k2, k3, k4 = jax.random.split(key, 4)
    bound1 = 1.0 / jnp.sqrt(in_features)
    bound2 = 1.0 / jnp.sqrt(hidden)
    w1 = jax.random.uniform(k1, (in_features, hidden), jnp.float32, -bound1, bound1)
    b1 = jax.random.uniform(k2, (1, hidden), jnp.float32, -bound1, bound1)
    w2 = jax.random.uniform(k3, (hidden, classes), jnp.float32, -bound2, bound2)
    b2 = jax.random.uniform(k4, (1, classes), jnp.float32, -bound2, bound2)
    return w1, b1, w2, b2


def fold_params(w1, b1, w2, b2):
    """Offline fold of the (linear) backbone into the head, done once in fp32,
    then zero-padded to a lane-dense class dim and cast to bf16 for the MXU."""
    w = w1 @ w2                 # (F, CLASSES) f32
    b = b1 @ w2 + b2            # (1, CLASSES) f32
    F = w.shape[0]
    w_pad = jnp.zeros((F, CLASSES_PAD), jnp.float32).at[:, :CLASSES].set(w)
    b_pad = jnp.zeros((1, CLASSES_PAD), jnp.float32).at[:, :CLASSES].set(b)
    # bf16 weights (dominant HBM traffic); bias stays f32 (added post-accumulate).
    return w_pad.astype(jnp.bfloat16), b_pad


if __name__ == "__main__":
    key = jax.random.PRNGKey(0)
    k_x, k_p = jax.random.split(key)

    # B=16 -> full bf16 sublane occupancy (16 rows per bf16 vreg); F = 4*16*16 = 1024.
    B, C, H, W = 16, 4, 16, 16
    x = jax.random.normal(k_x, (B, C, H, W), jnp.float32)

    w1, b1, w2, b2 = init_params(k_p, in_features=C * H * W)
    w_fold, b_fold = fold_params(w1, b1, w2, b2)

    out = jax.block_until_ready(model_setting_forward(x, w_fold, b_fold))
    assert out.shape == (B, CLASSES)

    x_flat = x.reshape(B, -1)

    # Reference 1: mirrors kernel arithmetic exactly (bf16 operands, f32 accum).
    ref_bf16 = (
        jnp.dot(x_flat.astype(jnp.bfloat16), w_fold, preferred_element_type=jnp.float32)
        + b_fold
    )[:, :CLASSES]
    assert jnp.allclose(out, ref_bf16, atol=2e-2, rtol=2e-2), "mismatch vs bf16-mirrored reference"

    # Reference 2: original two-layer fp32 forward (fold is exact for a linear
    # backbone; residual difference is only the bf16 cast of x and W_fold).
    ref_f32 = ((x_flat @ w1 + b1) @ w2 + b2)
    assert jnp.allclose(out, ref_f32, atol=5e-2, rtol=5e-2), "mismatch vs fp32 two-layer reference"

    print("KERNEL_OK")
</pallas_src>

<mosaic_0001>
module attributes {stable_mosaic.version = 11 : i64} {
  func.func @_fused_linear_kernel(%arg0: i32, %arg1: memref<16x1024xbf16, #tpu.memory_space<vmem>>, %arg2: memref<1024x128xbf16, #tpu.memory_space<vmem>>, %arg3: memref<1x128xf32, #tpu.memory_space<vmem>>, %arg4: memref<16x128xf32, #tpu.memory_space<vmem>>) attributes {dimension_semantics = [#tpu.dimension_semantics<parallel>], iteration_bounds = array<i64: 1>, scalar_prefetch = 0 : i64, scratch_operands = 0 : i64, tpu.core_type = #tpu.core_type<tc>, window_params = [{transform_indices = @transform_0, window_bounds = array<i64: 16, 1024>}, {pipeline_mode = #tpu.pipeline_mode<synchronous>, transform_indices = @transform_1, window_bounds = array<i64: 1024, 128>}, {pipeline_mode = #tpu.pipeline_mode<synchronous>, transform_indices = @transform_2, window_bounds = array<i64: 1, 128>}, {transform_indices = @transform_3, window_bounds = array<i64: 16, 128>}]} {
    %c0 = arith.constant 0 : index
    %c0_0 = arith.constant 0 : index
    %0 = vector.load %arg1[%c0, %c0_0] : memref<16x1024xbf16, #tpu.memory_space<vmem>>, vector<16x1024xbf16>
    %c0_1 = arith.constant 0 : index
    %c0_2 = arith.constant 0 : index
    %1 = vector.load %arg2[%c0_1, %c0_2] : memref<1024x128xbf16, #tpu.memory_space<vmem>>, vector<1024x128xbf16>
    %cst = arith.constant dense<0.000000e+00> : vector<16x128xf32>
    %2 = tpu.matmul %0, %1, %cst {dimension_numbers = #tpu.dot_dimension_numbers<[1], [0], [0], [1], [0, 0, 1, 1], [], []>} : vector<16x1024xbf16>, vector<1024x128xbf16>, vector<16x128xf32> -> vector<16x128xf32>
    %c0_3 = arith.constant 0 : index
    %c0_4 = arith.constant 0 : index
    %3 = vector.load %arg3[%c0_3, %c0_4] : memref<1x128xf32, #tpu.memory_space<vmem>>, vector<1x128xf32>
    %4 = vector.broadcast %3 : vector<1x128xf32> to vector<16x128xf32>
    %5 = arith.addf %2, %4 : vector<16x128xf32>
    %c0_5 = arith.constant 0 : index
    %c0_6 = arith.constant 0 : index
    %6 = vector.load %arg4[%c0_5, %c0_6] : memref<16x128xf32, #tpu.memory_space<vmem>>, vector<16x128xf32>
    tpu.vector_store %arg4[%c0_5, %c0_6], %5 {strides = array<i32>} : memref<16x128xf32, #tpu.memory_space<vmem>>, vector<16x128xf32>,
    return
  }
  func.func @transform_0(%arg0: i32) -> (i32, i32) {
    %c0_i32 = arith.constant 0 : i32
    %c0_i32_0 = arith.constant 0 : i32
    return %arg0, %c0_i32 : i32, i32
  }
  func.func @transform_1(%arg0: i32) -> (i32, i32) {
    %c0_i32 = arith.constant 0 : i32
    %c0_i32_0 = arith.constant 0 : i32
    %c0_i32_1 = arith.constant 0 : i32
    return %c0_i32, %c0_i32_0 : i32, i32
  }
  func.func @transform_2(%arg0: i32) -> (i32, i32) {
    %c0_i32 = arith.constant 0 : i32
    %c0_i32_0 = arith.constant 0 : i32
    %c0_i32_1 = arith.constant 0 : i32
    return %c0_i32, %c0_i32_0 : i32, i32
  }
  func.func @transform_3(%arg0: i32) -> (i32, i32) {
    %c0_i32 = arith.constant 0 : i32
    %c0_i32_0 = arith.constant 0 : i32
    return %arg0, %c0_i32 : i32, i32
  }
}

</mosaic_0001>

<llo_original>
// kernel: tpu_custom_call.1
$region0: #{tpu_custom_call.1}
  #allocation0 [shape = 'u32[]', space=smem, size = 0x4, offset = 0x4, fixed_abs, tag = 'smem constant byte address 0x4 - core index']
  #allocation1 [shape = 'u32[72,128]{1,0:T(1,128)}', space=vmem, size = 0x9000, scoped, tag = 'internal scratch']
  %s0 = inlined_call_operand.hbm [shape: bf16[16,1024], index: 0, kind: input, shape index: {}]
  %s1 = inlined_call_operand.hbm [shape: bf16[1024,128], index: 1, kind: input, shape index: {}]
  %s2 = inlined_call_operand.vmem [shape: f32[1,128], index: 2, kind: input, shape index: {}]
  %s3 = inlined_call_operand.hbm [shape: f32[16,128], index: 3, kind: output, shape index: {}]
  %s4 = sld [smem:[#allocation0]]
  $region30: #{tpu_custom_call.1} parent=0
    _
  %s6 = ssub.s32 1, %s4
  %s7 = scalar_select 0, %s6, %s4
  $region1: #{tpu_custom_call.1} parent=0
    #allocation2 [shape = 'u8[32768]{0}', space=vmem, size = 0x8000, scoped, tag = 'input window, operand 0, single buffered']
    #allocation3 [shape = 's32[1]{0}', space=sflag, size = 0x4, scoped, tag = 'scoped memory for tpu_custom_call.1']
    #allocation4 [shape = 's32[1]{0}', space=sflag, size = 0x4, scoped, tag = 'scoped memory for tpu_custom_call.1']
    #allocation5 [shape = 'u8[262144]{0}', space=vmem, size = 0x40000, scoped, tag = 'input window, operand 1, single buffered']
    #allocation6 [shape = 's32[1]{0}', space=sflag, size = 0x4, scoped, tag = 'scoped memory for tpu_custom_call.1']
    #allocation7 [shape = 'u8[8192]{0}', space=vmem, size = 0x2000, scoped, tag = 'output window, operand 0, single buffered']
    %8 = vsyncpa [#allocation3], 0
    %9 = vsyncpa [#allocation6], 0
    %10 = vsyncpa [#allocation4], 0
    // Predicated region
    $region2: #{tpu_custom_call.1} parent=1 // pred_check
      _
    $region3: #{tpu_custom_call.1} parent=1 // pred_check_branch
      %12 = sbr.rel (0) target = $region5
    $region4: #{tpu_custom_call.1} parent=1 // pred_region
      %14 = vsyncadd [#allocation3], 0
      %s15 = sshll.u32 %s0, 4
      %s16 = int_to_ptr.hbm [resolvable:$true] %s15
      %s17 = sshll.u32 [#allocation2], 4
      %s18 = int_to_ptr.vmem [resolvable:$true] %s17
      %23 = dma.hbm_to_vmem [thread:$0]  %s16, 1024, %s18, [#allocation3], 512, 512, 32
    $region5: #{tpu_custom_call.1} parent=1 // pred_fallthru
      _
    // Predicated region
    $region6: #{tpu_custom_call.1} parent=1 // pred_check
      _
    $region7: #{tpu_custom_call.1} parent=1 // pred_check_branch
      %25 = sbr.rel (0) target = $region9
    $region8: #{tpu_custom_call.1} parent=1 // pred_region
      %27 = vsyncadd [#allocation6], 0
      %s28 = sshll.u32 %s1, 4
      %s29 = int_to_ptr.hbm [resolvable:$true] %s28
      %s30 = sshll.u32 [#allocation5], 4
      %s31 = int_to_ptr.vmem [resolvable:$true] %s30
      %36 = dma.hbm_to_vmem [thread:$0]  %s29, 8192, %s31, [#allocation6], 64, 64, 4
    $region9: #{tpu_custom_call.1} parent=1 // pred_fallthru
      _
    // Predicated region
    $region10: #{tpu_custom_call.1} parent=1 // pred_check
      _
    $region11: #{tpu_custom_call.1} parent=1 // pred_check_branch
      %38 = sbr.rel (0) target = $region13
    $region12: #{tpu_custom_call.1} parent=1 // pred_region
      _
    $region13: #{tpu_custom_call.1} parent=1 // pred_fallthru
      _
    // Predicated region
    $region14: #{tpu_custom_call.1} parent=1 // pred_check
      _
    $region15: #{tpu_custom_call.1} parent=1 // pred_check_branch
      %40 = sbr.rel (0) target = $region17
    $region16: #{tpu_custom_call.1} parent=1 // pred_region
      %42 = dma.done [#allocation3], 1024
    $region17: #{tpu_custom_call.1} parent=1 // pred_fallthru
      _
    // Predicated region
    $region18: #{tpu_custom_call.1} parent=1 // pred_check
      _
    $region19: #{tpu_custom_call.1} parent=1 // pred_check_branch
      %44 = sbr.rel (0) target = $region21
    $region20: #{tpu_custom_call.1} parent=1 // pred_region
      %46 = dma.done [#allocation6], 8192
    $region21: #{tpu_custom_call.1} parent=1 // pred_fallthru
      _
    %v47 = vld [vmem:[#allocation2] sm:$0xff]
    %v48 = vld [vmem:[#allocation2 + $0x8] sm:$0xff]
    %v49 = vld [vmem:[#allocation2 + $0x10] sm:$0xff]
    %v50 = vld [vmem:[#allocation2 + $0x18] sm:$0xff]
    %v51 = vld [vmem:[#allocation2 + $0x20] sm:$0xff]
    %v52 = vld [vmem:[#allocation2 + $0x28] sm:$0xff]
    %v53 = vld [vmem:[#allocation2 + $0x30] sm:$0xff]
    %v54 = vld [vmem:[#allocation2 + $0x38] sm:$0xff]
    %v55 = vld [vmem:[#allocation5] sm:$0xf]
    %v56 = vld [vmem:[#allocation5 + $0x4] sm:$0xf]
    %v57 = vld [vmem:[#allocation5 + $0x8] sm:$0xf]
    %v58 = vld [vmem:[#allocation5 + $0xc] sm:$0xf]
    %v59 = vld [vmem:[#allocation5 + $0x10] sm:$0xf]
    %v60 = vld [vmem:[#allocation5 + $0x14] sm:$0xf]
    %v61 = vld [vmem:[#allocation5 + $0x18] sm:$0xf]
    %v62 = vld [vmem:[#allocation5 + $0x1c] sm:$0xf]
    %v63 = vld [vmem:[#allocation5 + $0x20] sm:$0xf]
    %v64 = vld [vmem:[#allocation5 + $0x24] sm:$0xf]
    %v65 = vld [vmem:[#allocation5 + $0x28] sm:$0xf]
    %v66 = vld [vmem:[#allocation5 + $0x2c] sm:$0xf]
    %v67 = vld [vmem:[#allocation5 + $0x30] sm:$0xf]
    %v68 = vld [vmem:[#allocation5 + $0x34] sm:$0xf]
    %v69 = vld [vmem:[#allocation5 + $0x38] sm:$0xf]
    %v70 = vld [vmem:[#allocation5 + $0x3c] sm:$0xf]
    %v71 = vld [vmem:[#allocation5 + $0x40] sm:$0xf]
    %v72 = vld [vmem:[#allocation5 + $0x44] sm:$0xf]
    %v73 = vld [vmem:[#allocation5 + $0x48] sm:$0xf]
    %v74 = vld [vmem:[#allocation5 + $0x4c] sm:$0xf]
    %v75 = vld [vmem:[#allocation5 + $0x50] sm:$0xf]
    %v76 = vld [vmem:[#allocation5 + $0x54] sm:$0xf]
    %v77 = vld [vmem:[#allocation5 + $0x58] sm:$0xf]
    %v78 = vld [vmem:[#allocation5 + $0x5c] sm:$0xf]
    %v79 = vld [vmem:[#allocation5 + $0x60] sm:$0xf]
    %v80 = vld [vmem:[#allocation5 + $0x64] sm:$0xf]
    %v81 = vld [vmem:[#allocation5 + $0x68] sm:$0xf]
    %v82 = vld [vmem:[#allocation5 + $0x6c] sm:$0xf]
    %v83 = vld [vmem:[#allocation5 + $0x70] sm:$0xf]
    %v84 = vld [vmem:[#allocation5 + $0x74] sm:$0xf]
    %v85 = vld [vmem:[#allocation5 + $0x78] sm:$0xf]
    %v86 = vld [vmem:[#allocation5 + $0x7c] sm:$0xf]
    %v87 = vld [vmem:[#allocation5 + $0x80] sm:$0xf]
    %v88 = vld [vmem:[#allocation5 + $0x84] sm:$0xf]
    %v89 = vld [vmem:[#allocation5 + $0x88] sm:$0xf]
    %v90 = vld [vmem:[#allocation5 + $0x8c] sm:$0xf]
    %v91 = vld [vmem:[#allocation5 + $0x90] sm:$0xf]
    %v92 = vld [vmem:[#allocation5 + $0x94] sm:$0xf]
    %v93 = vld [vmem:[#allocation5 + $0x98] sm:$0xf]
    %v94 = vld [vmem:[#allocation5 + $0x9c] sm:$0xf]
    %v95 = vld [vmem:[#allocation5 + $0xa0] sm:$0xf]
    %v96 = vld [vmem:[#allocation5 + $0xa4] sm:$0xf]
    %v97 = vld [vmem:[#allocation5 + $0xa8] sm:$0xf]
    %v98 = vld [vmem:[#allocation5 + $0xac] sm:$0xf]
    %v99 = vld [vmem:[#allocation5 + $0xb0] sm:$0xf]
    %v100 = vld [vmem:[#allocation5 + $0xb4] sm:$0xf]
    %v101 = vld [vmem:[#allocation5 + $0xb8] sm:$0xf]
    %v102 = vld [vmem:[#allocation5 + $0xbc] sm:$0xf]
    %v103 = vld [vmem:[#allocation5 + $0xc0] sm:$0xf]
    %v104 = vld [vmem:[#allocation5 + $0xc4] sm:$0xf]
    %v105 = vld [vmem:[#allocation5 + $0xc8] sm:$0xf]
    %v106 = vld [vmem:[#allocation5 + $0xcc] sm:$0xf]
    %v107 = vld [vmem:[#allocation5 + $0xd0] sm:$0xf]
    %v108 = vld [vmem:[#allocation5 + $0xd4] sm:$0xf]
    %v109 = vld [vmem:[#allocation5 + $0xd8] sm:$0xf]
    %v110 = vld [vmem:[#allocation5 + $0xdc] sm:$0xf]
    %v111 = vld [vmem:[#allocation5 + $0xe0] sm:$0xf]
    %v112 = vld [vmem:[#allocation5 + $0xe4] sm:$0xf]
    %v113 = vld [vmem:[#allocation5 + $0xe8] sm:$0xf]
    %v114 = vld [vmem:[#allocation5 + $0xec] sm:$0xf]
    %v115 = vld [vmem:[#allocation5 + $0xf0] sm:$0xf]
    %v116 = vld [vmem:[#allocation5 + $0xf4] sm:$0xf]
    %v117 = vld [vmem:[#allocation5 + $0xf8] sm:$0xf]
    %v118 = vld [vmem:[#allocation5 + $0xfc] sm:$0xf]
    %v119 = vld [vmem:[#allocation5 + $0x100] sm:$0xf]
    %v120 = vld [vmem:[#allocation5 + $0x104] sm:$0xf]
    %v121 = vld [vmem:[#allocation5 + $0x108] sm:$0xf]
    %v122 = vld [vmem:[#allocation5 + $0x10c] sm:$0xf]
    %v123 = vld [vmem:[#allocation5 + $0x110] sm:$0xf]
    %v124 = vld [vmem:[#allocation5 + $0x114] sm:$0xf]
    %v125 = vld [vmem:[#allocation5 + $0x118] sm:$0xf]
    %v126 = vld [vmem:[#allocation5 + $0x11c] sm:$0xf]
    %v127 = vld [vmem:[#allocation5 + $0x120] sm:$0xf]
    %v128 = vld [vmem:[#allocation5 + $0x124] sm:$0xf]
    %v129 = vld [vmem:[#allocation5 + $0x128] sm:$0xf]
    %v130 = vld [vmem:[#allocation5 + $0x12c] sm:$0xf]
    %v131 = vld [vmem:[#allocation5 + $0x130] sm:$0xf]
    %v132 = vld [vmem:[#allocation5 + $0x134] sm:$0xf]
    %v133 = vld [vmem:[#allocation5 + $0x138] sm:$0xf]
    %v134 = vld [vmem:[#allocation5 + $0x13c] sm:$0xf]
    %v135 = vld [vmem:[#allocation5 + $0x140] sm:$0xf]
    %v136 = vld [vmem:[#allocation5 + $0x144] sm:$0xf]
    %v137 = vld [vmem:[#allocation5 + $0x148] sm:$0xf]
    %v138 = vld [vmem:[#allocation5 + $0x14c] sm:$0xf]
    %v139 = vld [vmem:[#allocation5 + $0x150] sm:$0xf]
    %v140 = vld [vmem:[#allocation5 + $0x154] sm:$0xf]
    %v141 = vld [vmem:[#allocation5 + $0x158] sm:$0xf]
    %v142 = vld [vmem:[#allocation5 + $0x15c] sm:$0xf]
    %v143 = vld [vmem:[#allocation5 + $0x160] sm:$0xf]
    %v144 = vld [vmem:[#allocation5 + $0x164] sm:$0xf]
    %v145 = vld [vmem:[#allocation5 + $0x168] sm:$0xf]
    %v146 = vld [vmem:[#allocation5 + $0x16c] sm:$0xf]
    %v147 = vld [vmem:[#allocation5 + $0x170] sm:$0xf]
    %v148 = vld [vmem:[#allocation5 + $0x174] sm:$0xf]
    %v149 = vld [vmem:[#allocation5 + $0x178] sm:$0xf]
    %v150 = vld [vmem:[#allocation5 + $0x17c] sm:$0xf]
    %v151 = vld [vmem:[#allocation5 + $0x180] sm:$0xf]
    %v152 = vld [vmem:[#allocation5 + $0x184] sm:$0xf]
    %v153 = vld [vmem:[#allocation5 + $0x188] sm:$0xf]
    %v154 = vld [vmem:[#allocation5 + $0x18c] sm:$0xf]
    %v155 = vld [vmem:[#allocation5 + $0x190] sm:$0xf]
    %v156 = vld [vmem:[#allocation5 + $0x194] sm:$0xf]
    %v157 = vld [vmem:[#allocation5 + $0x198] sm:$0xf]
    %v158 = vld [vmem:[#allocation5 + $0x19c] sm:$0xf]
    %v159 = vld [vmem:[#allocation5 + $0x1a0] sm:$0xf]
    %v160 = vld [vmem:[#allocation5 + $0x1a4] sm:$0xf]
    %v161 = vld [vmem:[#allocation5 + $0x1a8] sm:$0xf]
    %v162 = vld [vmem:[#allocation5 + $0x1ac] sm:$0xf]
    %v163 = vld [vmem:[#allocation5 + $0x1b0] sm:$0xf]
    %v164 = vld [vmem:[#allocation5 + $0x1b4] sm:$0xf]
    %v165 = vld [vmem:[#allocation5 + $0x1b8] sm:$0xf]
    %v166 = vld [vmem:[#allocation5 + $0x1bc] sm:$0xf]
    %v167 = vld [vmem:[#allocation5 + $0x1c0] sm:$0xf]
    %v168 = vld [vmem:[#allocation5 + $0x1c4] sm:$0xf]
    %v169 = vld [vmem:[#allocation5 + $0x1c8] sm:$0xf]
    %v170 = vld [vmem:[#allocation5 + $0x1cc] sm:$0xf]
    %v171 = vld [vmem:[#allocation5 + $0x1d0] sm:$0xf]
    %v172 = vld [vmem:[#allocation5 + $0x1d4] sm:$0xf]
    %v173 = vld [vmem:[#allocation5 + $0x1d8] sm:$0xf]
    %v174 = vld [vmem:[#allocation5 + $0x1dc] sm:$0xf]
    %v175 = vld [vmem:[#allocation5 + $0x1e0] sm:$0xf]
    %v176 = vld [vmem:[#allocation5 + $0x1e4] sm:$0xf]
    %v177 = vld [vmem:[#allocation5 + $0x1e8] sm:$0xf]
    %v178 = vld [vmem:[#allocation5 + $0x1ec] sm:$0xf]
    %v179 = vld [vmem:[#allocation5 + $0x1f0] sm:$0xf]
    %v180 = vld [vmem:[#allocation5 + $0x1f4] sm:$0xf]
    %v181 = vld [vmem:[#allocation5 + $0x1f8] sm:$0xf]
    %v182 = vld [vmem:[#allocation5 + $0x1fc] sm:$0xf]
    %v183 = vld [vmem:[%s2] sm:$0x1]
    %v185 = vperm.slane %v183, 0
    %v195 = vunpack.c.l.b16 %v47
    %v196 = vunpack.c.h.b16 %v47
    %v197 = vunpack.c.l.b16 %v48
    %v198 = vunpack.c.h.b16 %v48
    %v199 = vunpack.c.l.b16 %v49
    %v200 = vunpack.c.h.b16 %v49
    %v201 = vunpack.c.l.b16 %v50
    %v202 = vunpack.c.h.b16 %v50
    %v203 = vunpack.c.l.b16 %v51
    %v204 = vunpack.c.h.b16 %v51
    %v205 = vunpack.c.l.b16 %v52
    %v206 = vunpack.c.h.b16 %v52
    %v207 = vunpack.c.l.b16 %v53
    %v208 = vunpack.c.h.b16 %v53
    %v209 = vunpack.c.l.b16 %v54
    %v210 = vunpack.c.h.b16 %v54
    %v211 = vpack.c.b16 %v203, %v195
    %v212 = vpack.c.b16 %v204, %v196
    %v213 = vpack.c.b16 %v205, %v197
    %v214 = vpack.c.b16 %v206, %v198
    %v215 = vpack.c.b16 %v207, %v199
    %v216 = vpack.c.b16 %v208, %v200
    %v217 = vpack.c.b16 %v209, %v201
    %v218 = vpack.c.b16 %v210, %v202
    %v355 = vunpack.c.l.b16 %v55
    %v356 = vunpack.c.l.b16 %v56
    %v357 = vunpack.c.l.b16 %v57
    %v358 = vunpack.c.l.b16 %v58
    %v359 = vunpack.c.l.b16 %v59
    %v360 = vunpack.c.l.b16 %v60
    %v361 = vunpack.c.l.b16 %v61
    %v362 = vunpack.c.l.b16 %v62
    %v363 = vunpack.c.l.b16 %v63
    %v364 = vunpack.c.l.b16 %v64
    %v365 = vunpack.c.l.b16 %v65
    %v366 = vunpack.c.l.b16 %v66
    %v367 = vunpack.c.l.b16 %v67
    %v368 = vunpack.c.l.b16 %v68
    %v369 = vunpack.c.l.b16 %v69
    %v370 = vunpack.c.l.b16 %v70
    %v371 = vunpack.c.l.b16 %v71
    %v372 = vunpack.c.l.b16 %v72
    %v373 = vunpack.c.l.b16 %v73
    %v374 = vunpack.c.l.b16 %v74
    %v375 = vunpack.c.l.b16 %v75
    %v376 = vunpack.c.l.b16 %v76
    %v377 = vunpack.c.l.b16 %v77
    %v378 = vunpack.c.l.b16 %v78
    %v379 = vunpack.c.l.b16 %v79
    %v380 = vunpack.c.l.b16 %v80
    %v381 = vunpack.c.l.b16 %v81
    %v382 = vunpack.c.l.b16 %v82
    %v383 = vunpack.c.l.b16 %v83
    %v384 = vunpack.c.l.b16 %v84
    %v385 = vunpack.c.l.b16 %v85
    %v386 = vunpack.c.l.b16 %v86
    %v387 = vunpack.c.l.b16 %v87
    %v388 = vunpack.c.l.b16 %v88
    %v389 = vunpack.c.l.b16 %v89
    %v390 = vunpack.c.l.b16 %v90
    %v391 = vunpack.c.l.b16 %v91
    %v392 = vunpack.c.l.b16 %v92
    %v393 = vunpack.c.l.b16 %v93
    %v394 = vunpack.c.l.b16 %v94
    %v395 = vunpack.c.l.b16 %v95
    %v396 = vunpack.c.l.b16 %v96
    %v397 = vunpack.c.l.b16 %v97
    %v398 = vunpack.c.l.b16 %v98
    %v399 = vunpack.c.l.b16 %v99
    %v400 = vunpack.c.l.b16 %v100
    %v401 = vunpack.c.l.b16 %v101
    %v402 = vunpack.c.l.b16 %v102
    %v403 = vunpack.c.l.b16 %v103
    %v404 = vunpack.c.l.b16 %v104
    %v405 = vunpack.c.l.b16 %v105
    %v406 = vunpack.c.l.b16 %v106
    %v407 = vunpack.c.l.b16 %v107
    %v408 = vunpack.c.l.b16 %v108
    %v409 = vunpack.c.l.b16 %v109
    %v410 = vunpack.c.l.b16 %v110
    %v411 = vunpack.c.l.b16 %v111
    %v412 = vunpack.c.l.b16 %v112
    %v413 = vunpack.c.l.b16 %v113
    %v414 = vunpack.c.l.b16 %v114
    %v415 = vunpack.c.l.b16 %v115
    %v416 = vunpack.c.l.b16 %v116
    %v417 = vunpack.c.l.b16 %v117
    %v418 = vunpack.c.l.b16 %v118
    %v419 = vunpack.c.l.b16 %v119
    %v420 = vunpack.c.l.b16 %v120
    %v421 = vunpack.c.l.b16 %v121
    %v422 = vunpack.c.l.b16 %v122
    %v423 = vunpack.c.l.b16 %v123
    %v424 = vunpack.c.l.b16 %v124
    %v425 = vunpack.c.l.b16 %v125
    %v426 = vunpack.c.l.b16 %v126
    %v427 = vunpack.c.l.b16 %v127
    %v428 = vunpack.c.l.b16 %v128
    %v429 = vunpack.c.l.b16 %v129
    %v430 = vunpack.c.l.b16 %v130
    %v431 = vunpack.c.l.b16 %v131
    %v432 = vunpack.c.l.b16 %v132
    %v433 = vunpack.c.l.b16 %v133
    %v434 = vunpack.c.l.b16 %v134
    %v435 = vunpack.c.l.b16 %v135
    %v436 = vunpack.c.l.b16 %v136
    %v437 = vunpack.c.l.b16 %v137
    %v438 = vunpack.c.l.b16 %v138
    %v439 = vunpack.c.l.b16 %v139
    %v440 = vunpack.c.l.b16 %v140
    %v441 = vunpack.c.l.b16 %v141
    %v442 = vunpack.c.l.b16 %v142
    %v443 = vunpack.c.l.b16 %v143
    %v444 = vunpack.c.l.b16 %v144
    %v445 = vunpack.c.l.b16 %v145
    %v446 = vunpack.c.l.b16 %v146
    %v447 = vunpack.c.l.b16 %v147
    %v448 = vunpack.c.l.b16 %v148
    %v449 = vunpack.c.l.b16 %v149
    %v450 = vunpack.c.l.b16 %v150
    %v451 = vunpack.c.l.b16 %v151
    %v452 = vunpack.c.l.b16 %v152
    %v453 = vunpack.c.l.b16 %v153
    %v454 = vunpack.c.l.b16 %v154
    %v455 = vunpack.c.l.b16 %v155
    %v456 = vunpack.c.l.b16 %v156
    %v457 = vunpack.c.l.b16 %v157
    %v458 = vunpack.c.l.b16 %v158
    %v459 = vunpack.c.l.b16 %v159
    %v460 = vunpack.c.l.b16 %v160
    %v461 = vunpack.c.l.b16 %v161
    %v462 = vunpack.c.l.b16 %v162
    %v463 = vunpack.c.l.b16 %v163
    %v464 = vunpack.c.l.b16 %v164
    %v465 = vunpack.c.l.b16 %v165
    %v466 = vunpack.c.l.b16 %v166
    %v467 = vunpack.c.l.b16 %v167
    %v468 = vunpack.c.l.b16 %v168
    %v469 = vunpack.c.l.b16 %v169
    %v470 = vunpack.c.l.b16 %v170
    %v471 = vunpack.c.l.b16 %v171
    %v472 = vunpack.c.l.b16 %v172
    %v473 = vunpack.c.l.b16 %v173
    %v474 = vunpack.c.l.b16 %v174
    %v475 = vunpack.c.l.b16 %v175
    %v476 = vunpack.c.l.b16 %v176
    %v477 = vunpack.c.l.b16 %v177
    %v478 = vunpack.c.l.b16 %v178
    %v479 = vunpack.c.l.b16 %v179
    %v480 = vunpack.c.l.b16 %v180
    %v481 = vunpack.c.l.b16 %v181
    %v482 = vunpack.c.l.b16 %v182
    %v483 = vpack.c.b16 %v356, %v355
    %v484 = vpack.c.b16 %v358, %v357
    %v485 = vpack.c.b16 %v360, %v359
    %v486 = vpack.c.b16 %v362, %v361
    %v487 = vpack.c.b16 %v364, %v363
    %v488 = vpack.c.b16 %v366, %v365
    %v489 = vpack.c.b16 %v368, %v367
    %v490 = vpack.c.b16 %v370, %v369
    %v491 = vpack.c.b16 %v372, %v371
    %v492 = vpack.c.b16 %v374, %v373
    %v493 = vpack.c.b16 %v376, %v375
    %v494 = vpack.c.b16 %v378, %v377
    %v495 = vpack.c.b16 %v380, %v379
    %v496 = vpack.c.b16 %v382, %v381
    %v497 = vpack.c.b16 %v384, %v383
    %v498 = vpack.c.b16 %v386, %v385
    %v499 = vpack.c.b16 %v388, %v387
    %v500 = vpack.c.b16 %v390, %v389
    %v501 = vpack.c.b16 %v392, %v391
    %v502 = vpack.c.b16 %v394, %v393
    %v503 = vpack.c.b16 %v396, %v395
    %v504 = vpack.c.b16 %v398, %v397
    %v505 = vpack.c.b16 %v400, %v399
    %v506 = vpack.c.b16 %v402, %v401
    %v507 = vpack.c.b16 %v404, %v403
    %v508 = vpack.c.b16 %v406, %v405
    %v509 = vpack.c.b16 %v408, %v407
    %v510 = vpack.c.b16 %v410, %v409
    %v511 = vpack.c.b16 %v412, %v411
    %v512 = vpack.c.b16 %v414, %v413
    %v513 = vpack.c.b16 %v416, %v415
    %v514 = vpack.c.b16 %v418, %v417
    %v515 = vpack.c.b16 %v420, %v419
    %v516 = vpack.c.b16 %v422, %v421
    %v517 = vpack.c.b16 %v424, %v423
    %v518 = vpack.c.b16 %v426, %v425
    %v519 = vpack.c.b16 %v428, %v427
    %v520 = vpack.c.b16 %v430, %v429
    %v521 = vpack.c.b16 %v432, %v431
    %v522 = vpack.c.b16 %v434, %v433
    %v523 = vpack.c.b16 %v436, %v435
    %v524 = vpack.c.b16 %v438, %v437
    %v525 = vpack.c.b16 %v440, %v439
    %v526 = vpack.c.b16 %v442, %v441
    %v527 = vpack.c.b16 %v444, %v443
    %v528 = vpack.c.b16 %v446, %v445
    %v529 = vpack.c.b16 %v448, %v447
    %v530 = vpack.c.b16 %v450, %v449
    %v531 = vpack.c.b16 %v452, %v451
    %v532 = vpack.c.b16 %v454, %v453
    %v533 = vpack.c.b16 %v456, %v455
    %v534 = vpack.c.b16 %v458, %v457
    %v535 = vpack.c.b16 %v460, %v459
    %v536 = vpack.c.b16 %v462, %v461
    %v537 = vpack.c.b16 %v464, %v463
    %v538 = vpack.c.b16 %v466, %v465
    %v539 = vpack.c.b16 %v468, %v467
    %v540 = vpack.c.b16 %v470, %v469
    %v541 = vpack.c.b16 %v472, %v471
    %v542 = vpack.c.b16 %v474, %v473
    %v543 = vpack.c.b16 %v476, %v475
    %v544 = vpack.c.b16 %v478, %v477
    %v545 = vpack.c.b16 %v480, %v479
    %v546 = vpack.c.b16 %v482, %v481
    %611 = vmatpush.bf16.msra.mxu0 %v490
    %612 = vmatpush.bf16.msra.mxu0 %v489
    %613 = vmatpush.bf16.msra.mxu0 %v488
    %614 = vmatpush.bf16.msra.mxu0 %v487
    %615 = vmatpush.bf16.msra.mxu0 %v486
    %616 = vmatpush.bf16.msra.mxu0 %v485
    %617 = vmatpush.bf16.msra.mxu0 %v484
    %618 = vmatpush.bf16.msra.mxu0 %v483
    %619 = vmatmul.bf16.gmra.mxu0 %v211
    %v620 = vpop.f32.mrf.mxu0
    %v621 = vadd.f32 %v185, %v620
    %v622 = vpop.f32.mrf.mxu0
    %v623 = vadd.f32 %v185, %v622
    %624 = vdwg.mxu0
    %625 = vmatpush.bf16.msra.mxu0 %v498
    %626 = vmatpush.bf16.msra.mxu0 %v497
    %627 = vmatpush.bf16.msra.mxu0 %v496
    %628 = vmatpush.bf16.msra.mxu0 %v495
    %629 = vmatpush.bf16.msra.mxu0 %v494
    %630 = vmatpush.bf16.msra.mxu0 %v493
    %631 = vmatpush.bf16.msra.mxu0 %v492
    %632 = vmatpush.bf16.msra.mxu0 %v491
    %633 = vmatmul.bf16.gmra.mxu0 %v212
    %v634 = vpop.f32.mrf.mxu0
    %v635 = vadd.f32 %v621, %v634
    %v636 = vpop.f32.mrf.mxu0
    %v637 = vadd.f32 %v623, %v636
    %638 = vdwg.mxu0
    %639 = vmatpush.bf16.msra.mxu0 %v506
    %640 = vmatpush.bf16.msra.mxu0 %v505
    %641 = vmatpush.bf16.msra.mxu0 %v504
    %642 = vmatpush.bf16.msra.mxu0 %v503
    %643 = vmatpush.bf16.msra.mxu0 %v502
    %644 = vmatpush.bf16.msra.mxu0 %v501
    %645 = vmatpush.bf16.msra.mxu0 %v500
    %646 = vmatpush.bf16.msra.mxu0 %v499
    %647 = vmatmul.bf16.gmra.mxu0 %v213
    %v648 = vpop.f32.mrf.mxu0
    %v649 = vadd.f32 %v635, %v648
    %v650 = vpop.f32.mrf.mxu0
    %v651 = vadd.f32 %v637, %v650
    %652 = vdwg.mxu0
    %653 = vmatpush.bf16.msra.mxu0 %v514
    %654 = vmatpush.bf16.msra.mxu0 %v513
    %655 = vmatpush.bf16.msra.mxu0 %v512
    %656 = vmatpush.bf16.msra.mxu0 %v511
    %657 = vmatpush.bf16.msra.mxu0 %v510
    %658 = vmatpush.bf16.msra.mxu0 %v509
    %659 = vmatpush.bf16.msra.mxu0 %v508
    %660 = vmatpush.bf16.msra.mxu0 %v507
    %661 = vmatmul.bf16.gmra.mxu0 %v214
    %v662 = vpop.f32.mrf.mxu0
    %v663 = vadd.f32 %v649, %v662
    %v664 = vpop.f32.mrf.mxu0
    %v665 = vadd.f32 %v651, %v664
    %666 = vdwg.mxu0
    %667 = vmatpush.bf16.msra.mxu0 %v522
    %668 = vmatpush.bf16.msra.mxu0 %v521
    %669 = vmatpush.bf16.msra.mxu0 %v520
    %670 = vmatpush.bf16.msra.mxu0 %v519
    %671 = vmatpush.bf16.msra.mxu0 %v518
    %672 = vmatpush.bf16.msra.mxu0 %v517
    %673 = vmatpush.bf16.msra.mxu0 %v516
    %674 = vmatpush.bf16.msra.mxu0 %v515
    %675 = vmatmul.bf16.gmra.mxu0 %v215
    %v676 = vpop.f32.mrf.mxu0
    %v677 = vadd.f32 %v663, %v676
    %v678 = vpop.f32.mrf.mxu0
    %v679 = vadd.f32 %v665, %v678
    %680 = vdwg.mxu0
    %681 = vmatpush.bf16.msra.mxu0 %v530
    %682 = vmatpush.bf16.msra.mxu0 %v529
    %683 = vmatpush.bf16.msra.mxu0 %v528
    %684 = vmatpush.bf16.msra.mxu0 %v527
    %685 = vmatpush.bf16.msra.mxu0 %v526
    %686 = vmatpush.bf16.msra.mxu0 %v525
    %687 = vmatpush.bf16.msra.mxu0 %v524
    %688 = vmatpush.bf16.msra.mxu0 %v523
    %689 = vmatmul.bf16.gmra.mxu0 %v216
    %v690 = vpop.f32.mrf.mxu0
    %v691 = vadd.f32 %v677, %v690
    %v692 = vpop.f32.mrf.mxu0
    %v693 = vadd.f32 %v679, %v692
    %694 = vdwg.mxu0
    %695 = vmatpush.bf16.msra.mxu0 %v538
    %696 = vmatpush.bf16.msra.mxu0 %v537
    %697 = vmatpush.bf16.msra.mxu0 %v536
    %698 = vmatpush.bf16.msra.mxu0 %v535
    %699 = vmatpush.bf16.msra.mxu0 %v534
    %700 = vmatpush.bf16.msra.mxu0 %v533
    %701 = vmatpush.bf16.msra.mxu0 %v532
    %702 = vmatpush.bf16.msra.mxu0 %v531
    %703 = vmatmul.bf16.gmra.mxu0 %v217
    %v704 = vpop.f32.mrf.mxu0
    %v705 = vadd.f32 %v691, %v704
    %v706 = vpop.f32.mrf.mxu0
    %v707 = vadd.f32 %v693, %v706
    %708 = vdwg.mxu0
    %709 = vmatpush.bf16.msra.mxu0 %v546
    %710 = vmatpush.bf16.msra.mxu0 %v545
    %711 = vmatpush.bf16.msra.mxu0 %v544
    %712 = vmatpush.bf16.msra.mxu0 %v543
    %713 = vmatpush.bf16.msra.mxu0 %v542
    %714 = vmatpush.bf16.msra.mxu0 %v541
    %715 = vmatpush.bf16.msra.mxu0 %v540
    %716 = vmatpush.bf16.msra.mxu0 %v539
    %717 = vmatmul.bf16.gmra.mxu0 %v218
    %v718 = vpop.f32.mrf.mxu0
    %v719 = vadd.f32 %v705, %v718
    %v720 = vpop.f32.mrf.mxu0
    %v721 = vadd.f32 %v707, %v720
    %722 = vdwg.mxu0
    %723 = vst [vmem:[#allocation7] sm:$0xff] %v719
    %724 = vst [vmem:[#allocation7 + $0x8] sm:$0xff] %v721
    // Predicated region
    $region22: #{tpu_custom_call.1} parent=1 // pred_check
      _
    $region23: #{tpu_custom_call.1} parent=1 // pred_check_branch
      %726 = sbr.rel (0) target = $region25
    $region24: #{tpu_custom_call.1} parent=1 // pred_region
      %728 = vsyncadd [#allocation4], 0
      %s729 = sshll.u32 [#allocation7], 4
      %s730 = int_to_ptr.vmem [resolvable:$true] %s729
      %s731 = sshll.u32 %s3, 4
      %s732 = int_to_ptr.hbm [resolvable:$true] %s731
      %737 = dma.vmem_to_hbm [thread:$0]  %s730, 256, %s732, [#allocation4], 128, 128, 8
    $region25: #{tpu_custom_call.1} parent=1 // pred_fallthru
      _
    // Predicated region
    $region26: #{tpu_custom_call.1} parent=1 // pred_check
      _
    $region27: #{tpu_custom_call.1} parent=1 // pred_check_branch
      %739 = sbr.rel (0) target = $region29
    $region28: #{tpu_custom_call.1} parent=1 // pred_region
      %741 = dma.done [#allocation4], 256
    $region29: #{tpu_custom_call.1} parent=1 // pred_fallthru
      _
    %742 = vsyncpa [#allocation3], 1
    %743 = vsyncpa [#allocation6], 1
    %744 = vsyncpa [#allocation4], 1

</llo_original>
